<compile_context>
chip_gen: v7x
topology: tpu7x:2x2x1
jax: 0.10.0
libtpu: 0.0.40
codegen_flags: <defaults>
</compile_context>

<pallas_src>
import jax
import jax.numpy as jnp
import numpy as np
from jax.experimental import pallas as pl
from jax.experimental.pallas import tpu as pltpu


def _round_up(x, m):
    return ((x + m - 1) // m) * m


def age_mlp_kernel(x_ref, w1_ref, b1_ref, w2_ref, b2_ref, o_ref):
    """One grid step: `block_rows` lane-dense rows (= block_rows * pack batch elems).

    x:  (block_rows, pack) f32   packed age scalars, pack = 128 // D
    w1: (pack, 128)        f32   kron(I_pack, W1^T)  block-diagonal layer-1 weight
    b1: (1, 128)           f32   tile(b1, pack)
    w2: (128, 128)         bf16|f32  kron(I_pack, W2^T) block-diagonal layer-2 weight
    b2: (1, 128)           f32   tile(b2, pack)
    o:  (block_rows, 128)        lane-dense output -> reshapes to (block_rows*pack, D) free
    """
    # Layer 1: tiny-K (K = pack) dot producing the packed 128-lane hidden row.
    h = jnp.dot(x_ref[...], w1_ref[...], preferred_element_type=jnp.float32)
    h = jnp.maximum(h + b1_ref[...], 0.0)                         # ReLU (VPU)
    # Layer 2: cast to the weight dtype (bf16 by default), accumulate in f32 on the MXU.
    y = jnp.dot(h.astype(w2_ref.dtype), w2_ref[...],
                preferred_element_type=jnp.float32)
    o_ref[...] = jnp.maximum(y + b2_ref[...], 0.0).astype(o_ref.dtype)  # ReLU, unmasked vst


# Below 2 * _MIN_SPLIT_ROWS packed rows, splitting the grid just adds per-step overhead.
_MIN_SPLIT_ROWS = 256  # packed rows (= 2048 batch elements)


def age_embed_mlp(age_scalar, w1_t, b1, w2_t, b2, *, block_rows=1024,
                  use_bf16_dot=True, out_dtype=jnp.float32, trim=True):
    """age_scalar: (B, 1) -> (B, D).  Matches the PyTorch AgeEmbedMLP forward.

    Weights are stored transposed vs. torch.nn.Linear (in_features, out_features):
    w1_t (1, D), w2_t (D, D), so the math is y = relu(relu(x @ w1_t + b1) @ w2_t + b2).

    trim=False returns the row-padded (b_pad, D) buffer (b_pad >= B, extra rows are
    garbage) so the consumer can slice/fuse lazily and skip the extra output copy.
    """
    B = age_scalar.shape[0]
    D = w1_t.shape[1]
    assert 128 % D == 0, "lane-dense packing assumes D divides 128"
    pack = 128 // D                                    # batch rows per 128-lane output row

    f32 = jnp.float32
    w2_dtype = jnp.bfloat16 if use_bf16_dot else f32
    eye = jnp.eye(pack, dtype=f32)
    # Block-diagonal / tiled parameters (tiny; built once outside the kernel).
    w1_blk = jnp.kron(eye, w1_t.astype(f32))                       # (pack, 128) f32
    w2_blk = jnp.kron(eye, w2_t.astype(f32)).astype(w2_dtype)      # (128, 128)  bf16|f32
    b1_til = jnp.tile(b1.astype(f32).reshape(1, D), (1, pack))     # (1, 128)    f32
    b2_til = jnp.tile(b2.astype(f32).reshape(1, D), (1, pack))     # (1, 128)    f32

    # --- choose rows / block_rows --------------------------------------------------
    row_align = 16 if out_dtype == jnp.bfloat16 else 8   # min output tile (16|8, 128)
    rows_needed = pl.cdiv(B, pack)
    rows = _round_up(rows_needed, row_align)              # pad only to min-tile multiple
    b_pad = rows * pack

    block_rows = max(row_align, (int(block_rows) // row_align) * row_align)
    if rows <= block_rows:
        if rows >= 2 * _MIN_SPLIT_ROWS:
            # Large batch fits one tile: halve it so the "parallel" grid has >= 2 steps
            # and v7x's two TensorCores both get work.
            block_rows = _round_up(pl.cdiv(rows, 2), row_align)
        else:
            block_rows = rows
    if rows >= 2 * _MIN_SPLIT_ROWS:
        # Best effort: prefer an even number of steps for small grids (v7x TC balance).
        n_steps = pl.cdiv(rows, block_rows)
        if n_steps % 2 == 1 and 1 < n_steps <= 8:
            block_rows = max(row_align, _round_up(pl.cdiv(rows, n_steps + 1), row_align))
    grid = (pl.cdiv(rows, block_rows),)                   # ragged last block handled by Pallas

    # --- pack the batch (free row-major reshapes, minimal padding) ------------------
    x = age_scalar.reshape(-1).astype(f32)
    if b_pad != B:
        x = jnp.pad(x, (0, b_pad - B))
    x_packed = x.reshape(rows, pack)

    out_packed = pl.pallas_call(
        age_mlp_kernel,
        out_shape=jax.ShapeDtypeStruct((rows, 128), out_dtype),
        grid=grid,
        in_specs=[
            pl.BlockSpec((block_rows, pack), lambda i: (i, 0)),   # stream batch tiles
            pl.BlockSpec((pack, 128), lambda i: (0, 0)),          # weights stay resident
            pl.BlockSpec((1, 128), lambda i: (0, 0)),
            pl.BlockSpec((128, 128), lambda i: (0, 0)),
            pl.BlockSpec((1, 128), lambda i: (0, 0)),
        ],
        out_specs=pl.BlockSpec((block_rows, 128), lambda i: (i, 0)),
        compiler_params=pltpu.CompilerParams(
            dimension_semantics=("parallel",)),   # shard batch tiles over both TCs (v7x)
    )(x_packed, w1_blk, b1_til, w2_blk, b2_til)

    # (rows, 128) -> (b_pad, D) is a free row-major reshape.
    out = out_packed.reshape(b_pad, D)
    if trim and b_pad != B:
        out = out[:B]          # small copy (<= 127 padded rows); skip with trim=False
    return out


def init_params(key, age_embed_dim=16):
    """Deterministic init mimicking torch.nn.Linear defaults U[-1/sqrt(fan_in), +...]."""
    D = age_embed_dim
    k1, k2, k3, k4 = jax.random.split(key, 4)
    bound1 = 1.0 / np.sqrt(1.0)
    w1_t = jax.random.uniform(k1, (1, D), jnp.float32, -bound1, bound1)
    b1 = jax.random.uniform(k2, (D,), jnp.float32, -bound1, bound1)
    bound2 = 1.0 / np.sqrt(D)
    w2_t = jax.random.uniform(k3, (D, D), jnp.float32, -bound2, bound2)
    b2 = jax.random.uniform(k4, (D,), jnp.float32, -bound2, bound2)
    return w1_t, b1, w2_t, b2


def reference(age_scalar, w1_t, b1, w2_t, b2):
    """Float64 numpy reference of the PyTorch forward."""
    a = np.asarray(age_scalar, np.float64)
    h = np.maximum(a @ np.asarray(w1_t, np.float64) + np.asarray(b1, np.float64), 0.0)
    y = np.maximum(h @ np.asarray(w2_t, np.float64) + np.asarray(b2, np.float64), 0.0)
    return y


if __name__ == "__main__":
    key = jax.random.PRNGKey(0)
    kp, kx = jax.random.split(key)

    age_embed_dim = 16
    w1_t, b1, w2_t, b2 = init_params(kp, age_embed_dim)

    # 1) Small batch, default config (bf16 second dot, f32 output): relaxed tolerance.
    age = jax.random.uniform(kx, (8, 1), jnp.float32, 0.0, 1.0)
    out = jax.block_until_ready(age_embed_mlp(age, w1_t, b1, w2_t, b2))
    assert out.shape == (8, age_embed_dim)
    np.testing.assert_allclose(np.asarray(out), reference(age, w1_t, b1, w2_t, b2),
                               rtol=3e-2, atol=3e-2)

    # 2) Multi-step grid with a ragged last block, full-f32 path: tight tolerance.
    age2 = jax.random.uniform(jax.random.PRNGKey(1), (2500, 1), jnp.float32, 0.0, 1.0)
    out2 = jax.block_until_ready(
        age_embed_mlp(age2, w1_t, b1, w2_t, b2, block_rows=128, use_bf16_dot=False))
    assert out2.shape == (2500, age_embed_dim)
    np.testing.assert_allclose(np.asarray(out2), reference(age2, w1_t, b1, w2_t, b2),
                               rtol=1e-5, atol=1e-5)

    # 3) Large batch: exercises the >=2-step split for TC parallelism + trim=False path.
    age3 = jax.random.uniform(jax.random.PRNGKey(2), (6000, 1), jnp.float32, 0.0, 1.0)
    out3 = jax.block_until_ready(age_embed_mlp(age3, w1_t, b1, w2_t, b2, trim=False))
    assert out3.shape[1] == age_embed_dim and out3.shape[0] >= 6000
    np.testing.assert_allclose(np.asarray(out3)[:6000],
                               reference(age3, w1_t, b1, w2_t, b2),
                               rtol=3e-2, atol=3e-2)

    # 4) bf16 output (halves writeback traffic): shape + relaxed numeric check.
    out4 = jax.block_until_ready(
        age_embed_mlp(age2, w1_t, b1, w2_t, b2, out_dtype=jnp.bfloat16))
    assert out4.shape == (2500, age_embed_dim) and out4.dtype == jnp.bfloat16
    np.testing.assert_allclose(np.asarray(out4.astype(jnp.float32)),
                               reference(age2, w1_t, b1, w2_t, b2),
                               rtol=5e-2, atol=5e-2)

    print("KERNEL_OK")
</pallas_src>

<mosaic_0001>
module attributes {stable_mosaic.version = 11 : i64} {
  func.func @age_mlp_kernel(%arg0: i32, %arg1: memref<8x8xf32, #tpu.memory_space<vmem>>, %arg2: memref<8x128xf32, #tpu.memory_space<vmem>>, %arg3: memref<1x128xf32, #tpu.memory_space<vmem>>, %arg4: memref<128x128xbf16, #tpu.memory_space<vmem>>, %arg5: memref<1x128xf32, #tpu.memory_space<vmem>>, %arg6: memref<8x128xf32, #tpu.memory_space<vmem>>) attributes {dimension_semantics = [#tpu.dimension_semantics<parallel>], iteration_bounds = array<i64: 1>, scalar_prefetch = 0 : i64, scratch_operands = 0 : i64, tpu.core_type = #tpu.core_type<tc>, window_params = [{transform_indices = @transform_0, window_bounds = array<i64: 8, 8>}, {pipeline_mode = #tpu.pipeline_mode<synchronous>, transform_indices = @transform_1, window_bounds = array<i64: 8, 128>}, {pipeline_mode = #tpu.pipeline_mode<synchronous>, transform_indices = @transform_2, window_bounds = array<i64: 1, 128>}, {pipeline_mode = #tpu.pipeline_mode<synchronous>, transform_indices = @transform_3, window_bounds = array<i64: 128, 128>}, {pipeline_mode = #tpu.pipeline_mode<synchronous>, transform_indices = @transform_4, window_bounds = array<i64: 1, 128>}, {transform_indices = @transform_5, window_bounds = array<i64: 8, 128>}]} {
    %c0 = arith.constant 0 : index
    %c0_0 = arith.constant 0 : index
    %0 = vector.load %arg1[%c0, %c0_0] : memref<8x8xf32, #tpu.memory_space<vmem>>, vector<8x8xf32>
    %c0_1 = arith.constant 0 : index
    %c0_2 = arith.constant 0 : index
    %1 = vector.load %arg2[%c0_1, %c0_2] : memref<8x128xf32, #tpu.memory_space<vmem>>, vector<8x128xf32>
    %cst = arith.constant dense<0.000000e+00> : vector<8x128xf32>
    %2 = tpu.matmul %0, %1, %cst {dimension_numbers = #tpu.dot_dimension_numbers<[1], [0], [0], [1], [0, 0, 1, 1], [], []>} : vector<8x8xf32>, vector<8x128xf32>, vector<8x128xf32> -> vector<8x128xf32>
    %c0_3 = arith.constant 0 : index
    %c0_4 = arith.constant 0 : index
    %3 = vector.load %arg3[%c0_3, %c0_4] : memref<1x128xf32, #tpu.memory_space<vmem>>, vector<1x128xf32>
    %4 = vector.broadcast %3 : vector<1x128xf32> to vector<8x128xf32>
    %5 = arith.addf %2, %4 : vector<8x128xf32>
    %cst_5 = arith.constant 0.000000e+00 : f32
    %6 = vector.broadcast %cst_5 : f32 to vector<8x128xf32>
    %7 = arith.maximumf %5, %6 : vector<8x128xf32>
    %8 = arith.truncf %7 : vector<8x128xf32> to vector<8x128xbf16>
    %c0_6 = arith.constant 0 : index
    %c0_7 = arith.constant 0 : index
    %9 = vector.load %arg4[%c0_6, %c0_7] : memref<128x128xbf16, #tpu.memory_space<vmem>>, vector<128x128xbf16>
    %cst_8 = arith.constant dense<0.000000e+00> : vector<8x128xf32>
    %10 = tpu.matmul %8, %9, %cst_8 {dimension_numbers = #tpu.dot_dimension_numbers<[1], [0], [0], [1], [0, 0, 1, 1], [], []>} : vector<8x128xbf16>, vector<128x128xbf16>, vector<8x128xf32> -> vector<8x128xf32>
    %c0_9 = arith.constant 0 : index
    %c0_10 = arith.constant 0 : index
    %11 = vector.load %arg5[%c0_9, %c0_10] : memref<1x128xf32, #tpu.memory_space<vmem>>, vector<1x128xf32>
    %12 = vector.broadcast %11 : vector<1x128xf32> to vector<8x128xf32>
    %13 = arith.addf %10, %12 : vector<8x128xf32>
    %cst_11 = arith.constant 0.000000e+00 : f32
    %14 = vector.broadcast %cst_11 : f32 to vector<8x128xf32>
    %15 = arith.maximumf %13, %14 : vector<8x128xf32>
    %c0_12 = arith.constant 0 : index
    %c0_13 = arith.constant 0 : index
    %16 = vector.load %arg6[%c0_12, %c0_13] : memref<8x128xf32, #tpu.memory_space<vmem>>, vector<8x128xf32>
    tpu.vector_store %arg6[%c0_12, %c0_13], %15 {strides = array<i32>} : memref<8x128xf32, #tpu.memory_space<vmem>>, vector<8x128xf32>,
    return
  }
  func.func @transform_0(%arg0: i32) -> (i32, i32) {
    %c0_i32 = arith.constant 0 : i32
    %c0_i32_0 = arith.constant 0 : i32
    return %arg0, %c0_i32 : i32, i32
  }
  func.func @transform_1(%arg0: i32) -> (i32, i32) {
    %c0_i32 = arith.constant 0 : i32
    %c0_i32_0 = arith.constant 0 : i32
    %c0_i32_1 = arith.constant 0 : i32
    return %c0_i32, %c0_i32_0 : i32, i32
  }
  func.func @transform_2(%arg0: i32) -> (i32, i32) {
    %c0_i32 = arith.constant 0 : i32
    %c0_i32_0 = arith.constant 0 : i32
    %c0_i32_1 = arith.constant 0 : i32
    return %c0_i32, %c0_i32_0 : i32, i32
  }
  func.func @transform_3(%arg0: i32) -> (i32, i32) {
    %c0_i32 = arith.constant 0 : i32
    %c0_i32_0 = arith.constant 0 : i32
    %c0_i32_1 = arith.constant 0 : i32
    return %c0_i32, %c0_i32_0 : i32, i32
  }
  func.func @transform_4(%arg0: i32) -> (i32, i32) {
    %c0_i32 = arith.constant 0 : i32
    %c0_i32_0 = arith.constant 0 : i32
    %c0_i32_1 = arith.constant 0 : i32
    return %c0_i32, %c0_i32_0 : i32, i32
  }
  func.func @transform_5(%arg0: i32) -> (i32, i32) {
    %c0_i32 = arith.constant 0 : i32
    %c0_i32_0 = arith.constant 0 : i32
    return %arg0, %c0_i32 : i32, i32
  }
}

</mosaic_0001>

<llo_original>
// kernel: tpu_custom_call.1
$region0: #{tpu_custom_call.1}
  #allocation0 [shape = 'u32[]', space=smem, size = 0x4, offset = 0x4, fixed_abs, tag = 'smem constant byte address 0x4 - core index']
  #allocation1 [shape = 'u32[144,128]{1,0:T(1,128)}', space=vmem, size = 0x12000, scoped, tag = 'internal scratch']
  %s0 = inlined_call_operand.hbm [shape: f32[8,8], index: 0, kind: input, shape index: {}]
  %s1 = inlined_call_operand.hbm [shape: f32[8,128], index: 1, kind: input, shape index: {}]
  %s2 = inlined_call_operand.vmem [shape: f32[1,128], index: 2, kind: input, shape index: {}]
  %s3 = inlined_call_operand.hbm [shape: bf16[128,128], index: 3, kind: input, shape index: {}]
  %s4 = inlined_call_operand.vmem [shape: f32[1,128], index: 4, kind: input, shape index: {}]
  %s5 = inlined_call_operand.hbm [shape: f32[8,128], index: 5, kind: output, shape index: {}]
  %s6 = sld [smem:[#allocation0]]
  $region42: #{tpu_custom_call.1} parent=0
    _
  %s8 = ssub.s32 1, %s6
  %s9 = scalar_select 0, %s8, %s6
  $region1: #{tpu_custom_call.1} parent=0
    #allocation2 [shape = 'u8[4096]{0}', space=vmem, size = 0x1000, scoped, tag = 'input window, operand 0, single buffered']
    #allocation3 [shape = 's32[1]{0}', space=sflag, size = 0x4, scoped, tag = 'scoped memory for tpu_custom_call.1']
    #allocation4 [shape = 's32[1]{0}', space=sflag, size = 0x4, scoped, tag = 'scoped memory for tpu_custom_call.1']
    #allocation5 [shape = 'u8[4096]{0}', space=vmem, size = 0x1000, scoped, tag = 'input window, operand 1, single buffered']
    #allocation6 [shape = 's32[1]{0}', space=sflag, size = 0x4, scoped, tag = 'scoped memory for tpu_custom_call.1']
    #allocation7 [shape = 'u8[32768]{0}', space=vmem, size = 0x8000, scoped, tag = 'input window, operand 3, single buffered']
    #allocation8 [shape = 'u8[4096]{0}', space=vmem, size = 0x1000, scoped, tag = 'output window, operand 0, single buffered']
    %10 = vsyncpa [#allocation3], 0
    %11 = vsyncpa [#allocation6], 0
    %12 = vsyncpa [#allocation4], 0
    // Predicated region
    $region2: #{tpu_custom_call.1} parent=1 // pred_check
      _
    $region3: #{tpu_custom_call.1} parent=1 // pred_check_branch
      %14 = sbr.rel (0) target = $region5
    $region4: #{tpu_custom_call.1} parent=1 // pred_region
      %s16 = ssub.s32 128, 128
      %17 = vsyncadd [#allocation3], %s16
      %s19 = sshll.u32 [#allocation2], 4
      %s20 = int_to_ptr.vmem [resolvable:$true] %s19
      %22 = dma.hbm_to_vmem [thread:$0]  %s0, 128, %s20, [#allocation3]
    $region5: #{tpu_custom_call.1} parent=1 // pred_fallthru
      _
    // Predicated region
    $region6: #{tpu_custom_call.1} parent=1 // pred_check
      _
    $region7: #{tpu_custom_call.1} parent=1 // pred_check_branch
      %24 = sbr.rel (0) target = $region9
    $region8: #{tpu_custom_call.1} parent=1 // pred_region
      %s26 = ssub.s32 128, 128
      %27 = vsyncadd [#allocation6], %s26
      %s29 = sshll.u32 [#allocation5], 4
      %s30 = int_to_ptr.vmem [resolvable:$true] %s29
      %32 = dma.hbm_to_vmem [thread:$0]  %s1, 128, %s30, [#allocation6]
    $region9: #{tpu_custom_call.1} parent=1 // pred_fallthru
      _
    // Predicated region
    $region10: #{tpu_custom_call.1} parent=1 // pred_check
      _
    $region11: #{tpu_custom_call.1} parent=1 // pred_check_branch
      %34 = sbr.rel (0) target = $region13
    $region12: #{tpu_custom_call.1} parent=1 // pred_region
      _
    $region13: #{tpu_custom_call.1} parent=1 // pred_fallthru
      _
    // Predicated region
    $region14: #{tpu_custom_call.1} parent=1 // pred_check
      _
    $region15: #{tpu_custom_call.1} parent=1 // pred_check_branch
      %36 = sbr.rel (0) target = $region17
    $region16: #{tpu_custom_call.1} parent=1 // pred_region
      %s38 = ssub.s32 1024, 1024
      %39 = vsyncadd [#allocation6], %s38
      %s40 = sshll.u32 [#allocation7], 4
      %s41 = int_to_ptr.vmem [resolvable:$true] %s40
      %46 = dma.hbm_to_vmem [thread:$0]  %s3, 1024, %s41, [#allocation6], 64, 64, 4
    $region17: #{tpu_custom_call.1} parent=1 // pred_fallthru
      _
    // Predicated region
    $region18: #{tpu_custom_call.1} parent=1 // pred_check
      _
    $region19: #{tpu_custom_call.1} parent=1 // pred_check_branch
      %48 = sbr.rel (0) target = $region21
    $region20: #{tpu_custom_call.1} parent=1 // pred_region
      _
    $region21: #{tpu_custom_call.1} parent=1 // pred_fallthru
      _
    // Predicated region
    $region22: #{tpu_custom_call.1} parent=1 // pred_check
      _
    $region23: #{tpu_custom_call.1} parent=1 // pred_check_branch
      %50 = sbr.rel (0) target = $region25
    $region24: #{tpu_custom_call.1} parent=1 // pred_region
      %51 = dma.done [#allocation3], 128
    $region25: #{tpu_custom_call.1} parent=1 // pred_fallthru
      _
    // Predicated region
    $region26: #{tpu_custom_call.1} parent=1 // pred_check
      _
    $region27: #{tpu_custom_call.1} parent=1 // pred_check_branch
      %53 = sbr.rel (0) target = $region29
    $region28: #{tpu_custom_call.1} parent=1 // pred_region
      %54 = dma.done [#allocation6], 128
    $region29: #{tpu_custom_call.1} parent=1 // pred_fallthru
      _
    // Predicated region
    $region30: #{tpu_custom_call.1} parent=1 // pred_check
      _
    $region31: #{tpu_custom_call.1} parent=1 // pred_check_branch
      %56 = sbr.rel (0) target = $region33
    $region32: #{tpu_custom_call.1} parent=1 // pred_region
      %57 = dma.done [#allocation6], 1024
    $region33: #{tpu_custom_call.1} parent=1 // pred_fallthru
      _
    %v59 = vld [vmem:[#allocation2] sm:$0xff]
    %v60 = vld [vmem:[#allocation5] sm:$0xff]
    %v61 = vld [vmem:[%s2] sm:$0x1]
    %v63 = vlaneseq
    %v64 = vshrl.u32 %v63, 7
    %v65 = vsub.s32 0, %v64
    %v66 = vrot.slane %v61, %v65
    %vm68 = vcmask 64512
    %v70 = vsel %vm68, %v59, 0
    %72 = vmatprep.subr.mxu0 0.0
    %73 = vmatpush1.msra.mxu0 %v60
    %74 = vmatprep.subr.mxu0 0.0
    %75 = vmatpush1.msra.mxu0 0.0
    %76 = vmatprep.subr.mxu0 0.0
    %77 = vmatpush1.msra.mxu0 0.0
    %78 = vmatprep.subr.mxu0 0.0
    %79 = vmatpush1.msra.mxu0 0.0
    %80 = vmatprep.subr.mxu0 0.0
    %81 = vmatpush1.msra.mxu0 0.0
    %82 = vmatprep.subr.mxu0 0.0
    %83 = vmatpush1.msra.mxu0 0.0
    %84 = vmatprep.subr.mxu0 0.0
    %85 = vmatpush1.msra.mxu0 0.0
    %86 = vmatprep.subr.mxu0 0.0
    %87 = vmatpush1.msra.mxu0 0.0
    %88 = vmatprep.subr.mxu0 0.0
    %89 = vmatpush1.msra.mxu0 0.0
    %90 = vmatprep.subr.mxu0 0.0
    %91 = vmatpush1.msra.mxu0 0.0
    %92 = vmatprep.subr.mxu0 0.0
    %93 = vmatpush1.msra.mxu0 0.0
    %94 = vmatprep.subr.mxu0 0.0
    %95 = vmatpush1.msra.mxu0 0.0
    %96 = vmatprep.subr.mxu0 0.0
    %97 = vmatpush1.msra.mxu0 0.0
    %98 = vmatprep.subr.mxu0 0.0
    %99 = vmatpush1.msra.mxu0 0.0
    %100 = vmatprep.subr.mxu0 0.0
    %101 = vmatpush1.msra.mxu0 0.0
    %102 = vmatprep.subr.mxu0 0.0
    %103 = vmatpush1.msra.mxu0 0.0
    %104 = vmatprep.subr.mxu0 0.0
    %105 = vmatpush1.msra.mxu0 0.0
    %106 = vmatprep.subr.mxu0 0.0
    %107 = vmatpush1.msra.mxu0 0.0
    %108 = vmatprep.subr.mxu0 0.0
    %109 = vmatpush1.msra.mxu0 0.0
    %110 = vmatprep.subr.mxu0 0.0
    %111 = vmatpush1.msra.mxu0 0.0
    %112 = vmatprep.subr.mxu0 0.0
    %113 = vmatpush1.msra.mxu0 0.0
    %114 = vmatprep.subr.mxu0 0.0
    %115 = vmatpush1.msra.mxu0 0.0
    %116 = vmatprep.subr.mxu0 0.0
    %117 = vmatpush1.msra.mxu0 0.0
    %118 = vmatprep.subr.mxu0 0.0
    %119 = vmatpush1.msra.mxu0 0.0
    %120 = vmatprep.subr.mxu0 0.0
    %121 = vmatpush1.msra.mxu0 0.0
    %122 = vmatprep.subr.mxu0 0.0
    %123 = vmatpush1.msra.mxu0 0.0
    %124 = vmatprep.subr.mxu0 0.0
    %125 = vmatpush1.msra.mxu0 0.0
    %126 = vmatprep.subr.mxu0 0.0
    %127 = vmatpush1.msra.mxu0 0.0
    %128 = vmatprep.subr.mxu0 0.0
    %129 = vmatpush1.msra.mxu0 0.0
    %130 = vmatprep.subr.mxu0 0.0
    %131 = vmatpush1.msra.mxu0 0.0
    %132 = vmatprep.subr.mxu0 0.0
    %133 = vmatpush1.msra.mxu0 0.0
    %134 = vmatprep.subr.mxu0 0.0
    %135 = vmatpush1.msra.mxu0 0.0
    %136 = vmatprep.mubr.f32.mxu0 0.0
    %137 = vmatmul.mubr.f32.gmra.mrb[0].mxu0 %v70
    %v138 = vpop.f32.mrb[0].mxu0
    %v139 = vadd.f32 %v66, %v138
    %v140 = vpop.f32.mrb[0].mxu0
    %141 = vdwg.mxu0
    %v142 = vmax.f32 %v139, 0.0
    %v143 = vpack.c.bf16 %v142, %v142
    %v144 = vld [vmem:[#allocation7] sm:$0xf]
    %v145 = vld [vmem:[#allocation7 + $0x4] sm:$0xf]
    %v146 = vld [vmem:[#allocation7 + $0x8] sm:$0xf]
    %v147 = vld [vmem:[#allocation7 + $0xc] sm:$0xf]
    %v148 = vld [vmem:[#allocation7 + $0x10] sm:$0xf]
    %v149 = vld [vmem:[#allocation7 + $0x14] sm:$0xf]
    %v150 = vld [vmem:[#allocation7 + $0x18] sm:$0xf]
    %v151 = vld [vmem:[#allocation7 + $0x1c] sm:$0xf]
    %v152 = vld [vmem:[#allocation7 + $0x20] sm:$0xf]
    %v153 = vld [vmem:[#allocation7 + $0x24] sm:$0xf]
    %v154 = vld [vmem:[#allocation7 + $0x28] sm:$0xf]
    %v155 = vld [vmem:[#allocation7 + $0x2c] sm:$0xf]
    %v156 = vld [vmem:[#allocation7 + $0x30] sm:$0xf]
    %v157 = vld [vmem:[#allocation7 + $0x34] sm:$0xf]
    %v158 = vld [vmem:[#allocation7 + $0x38] sm:$0xf]
    %v159 = vld [vmem:[#allocation7 + $0x3c] sm:$0xf]
    %v160 = vld [vmem:[%s4] sm:$0x1]
    %v162 = vlaneseq
    %v163 = vshrl.u32 %v162, 7
    %v164 = vsub.s32 0, %v163
    %v165 = vrot.slane %v160, %v164
    %v183 = vunpack.c.l.b16 %v144
    %v184 = vunpack.c.l.b16 %v145
    %v185 = vunpack.c.l.b16 %v146
    %v186 = vunpack.c.l.b16 %v147
    %v187 = vunpack.c.l.b16 %v148
    %v188 = vunpack.c.l.b16 %v149
    %v189 = vunpack.c.l.b16 %v150
    %v190 = vunpack.c.l.b16 %v151
    %v191 = vunpack.c.l.b16 %v152
    %v192 = vunpack.c.l.b16 %v153
    %v193 = vunpack.c.l.b16 %v154
    %v194 = vunpack.c.l.b16 %v155
    %v195 = vunpack.c.l.b16 %v156
    %v196 = vunpack.c.l.b16 %v157
    %v197 = vunpack.c.l.b16 %v158
    %v198 = vunpack.c.l.b16 %v159
    %v199 = vpack.c.b16 %v184, %v183
    %v200 = vpack.c.b16 %v186, %v185
    %v201 = vpack.c.b16 %v188, %v187
    %v202 = vpack.c.b16 %v190, %v189
    %v203 = vpack.c.b16 %v192, %v191
    %v204 = vpack.c.b16 %v194, %v193
    %v205 = vpack.c.b16 %v196, %v195
    %v206 = vpack.c.b16 %v198, %v197
    %215 = vmatprep.subr.bf16.mxu0 0
    %216 = vmatpush1.bf16.msra.mxu0 %v199
    %217 = vmatprep.subr.bf16.mxu0 0
    %218 = vmatpush1.bf16.msra.mxu0 %v200
    %219 = vmatprep.subr.bf16.mxu0 0
    %220 = vmatpush1.bf16.msra.mxu0 %v201
    %221 = vmatprep.subr.bf16.mxu0 0
    %222 = vmatpush1.bf16.msra.mxu0 %v202
    %223 = vmatprep.subr.bf16.mxu0 0
    %224 = vmatpush1.bf16.msra.mxu0 %v203
    %225 = vmatprep.subr.bf16.mxu0 0
    %226 = vmatpush1.bf16.msra.mxu0 %v204
    %227 = vmatprep.subr.bf16.mxu0 0
    %228 = vmatpush1.bf16.msra.mxu0 %v205
    %229 = vmatprep.subr.bf16.mxu0 0
    %230 = vmatpush1.bf16.msra.mxu0 %v206
    %231 = vmatprep.subr.bf16.mxu0 0
    %232 = vmatpush1.bf16.msra.mxu0 0
    %233 = vmatprep.subr.bf16.mxu0 0
    %234 = vmatpush1.bf16.msra.mxu0 0
    %235 = vmatprep.subr.bf16.mxu0 0
    %236 = vmatpush1.bf16.msra.mxu0 0
    %237 = vmatprep.subr.bf16.mxu0 0
    %238 = vmatpush1.bf16.msra.mxu0 0
    %239 = vmatprep.subr.bf16.mxu0 0
    %240 = vmatpush1.bf16.msra.mxu0 0
    %241 = vmatprep.subr.bf16.mxu0 0
    %242 = vmatpush1.bf16.msra.mxu0 0
    %243 = vmatprep.subr.bf16.mxu0 0
    %244 = vmatpush1.bf16.msra.mxu0 0
    %245 = vmatprep.subr.bf16.mxu0 0
    %246 = vmatpush1.bf16.msra.mxu0 0
    %247 = vmatprep.mubr.bf16.mxu0 0
    %248 = vmatmul.mubr.bf16.gmra.mrb[0].mxu0 %v143
    %v249 = vpop.f32.mrb[0].mxu0
    %v250 = vadd.f32 %v165, %v249
    %v251 = vpop.f32.mrb[0].mxu0
    %v252 = vpop.f32.mrb[0].mxu0
    %v253 = vpop.f32.mrb[0].mxu0
    %254 = vdwg.mxu0
    %v255 = vmax.f32 %v250, 0.0
    %256 = vst [vmem:[#allocation8] sm:$0xff] %v255
    // Predicated region
    $region34: #{tpu_custom_call.1} parent=1 // pred_check
      _
    $region35: #{tpu_custom_call.1} parent=1 // pred_check_branch
      %258 = sbr.rel (0) target = $region37
    $region36: #{tpu_custom_call.1} parent=1 // pred_region
      %s260 = ssub.s32 128, 128
      %261 = vsyncadd [#allocation4], %s260
      %s263 = sshll.u32 [#allocation8], 4
      %s264 = int_to_ptr.vmem [resolvable:$true] %s263
      %266 = dma.vmem_to_hbm [thread:$0]  %s264, 128, %s5, [#allocation4]
    $region37: #{tpu_custom_call.1} parent=1 // pred_fallthru
      _
    // Predicated region
    $region38: #{tpu_custom_call.1} parent=1 // pred_check
      _
    $region39: #{tpu_custom_call.1} parent=1 // pred_check_branch
      %268 = sbr.rel (0) target = $region41
    $region40: #{tpu_custom_call.1} parent=1 // pred_region
      %269 = dma.done [#allocation4], 128
    $region41: #{tpu_custom_call.1} parent=1 // pred_fallthru
      _
    %270 = vsyncpa [#allocation3], 1
    %271 = vsyncpa [#allocation6], 1
    %272 = vsyncpa [#allocation4], 1

</llo_original>
